<compile_context>
chip_gen: v7x
topology: tpu7x:2x2x1
jax: 0.10.0
libtpu: 0.0.40
codegen_flags: <defaults>
</compile_context>

<pallas_src>
import numpy as np
import jax
import jax.numpy as jnp
from jax.experimental import pallas as pl
from jax.experimental.pallas import tpu as pltpu


# ----------------------------------------------------------------------------
# Fused kernel factory.  `tap_counts` = kernel size of each conv layer
# (stride == kernel).  Activations are channels-last 2-D (rows = batch*length,
# lanes = channels); a stride-k conv's k taps are the k contiguous row-chunks
# of the current activation, so each layer is k tap-matmuls + bias + act.
# ----------------------------------------------------------------------------
def make_encoder_kernel(tap_counts):
    def kernel(*refs):
        x_ref, o_ref = refs[0], refs[-1]
        params = refs[1:-1]

        # Parse the flat (w_tap0, .., w_tap{k-1}, bias) per-layer ref list.
        layers = []
        idx = 0
        for k in tap_counts:
            layers.append((params[idx:idx + k], params[idx + k]))
            idx += k + 1

        def leaky(h):                              # LeakyReLU(0.2), f32 on VPU
            return jnp.maximum(h, 0.2 * h)

        def conv(h, w_refs, b_ref):
            """stride==kernel Conv1d (+folded BN) as k tap matmuls (bf16 MXU,
            f32 accumulate).  Tap j lives in row-chunk j of `h`."""
            hb = h.astype(jnp.bfloat16)
            k = len(w_refs)
            m = hb.shape[0] // k
            acc = jnp.dot(hb[0:m], w_refs[0][...],
                          preferred_element_type=jnp.float32)
            for j in range(1, k):
                acc = acc + jnp.dot(hb[j * m:(j + 1) * m], w_refs[j][...],
                                    preferred_element_type=jnp.float32)
            return acc + b_ref[...]                # (1, Cout) bias, f32

        (w1, b1), (w2, b2), (w3, b3), (w4, b4), (w5, b5) = layers

        h = x_ref[...]                             # (tb*L, Cin) bf16
        h = leaky(conv(h, w1, b1))                 # conv1            -> lrelu
        h = leaky(conv(h, w2, b2))                 # conv2 + BN1 fold -> lrelu
        h = leaky(conv(h, w3, b3))                 # conv3 + BN2 fold -> lrelu
        h = leaky(conv(h, w4, b4))                 # conv4 + BN3 fold -> lrelu
        h = conv(h, w5, b5)                        # conv5
        o_ref[...] = jnp.tanh(h)                   # (tb*L3, 16) f32

    return kernel


# ----------------------------------------------------------------------------
# Host-side parameter preparation: per-tap (Cin, Cout) matrices, eval-mode BN
# folded in, weights cast to bf16 (biases stay f32).
# ----------------------------------------------------------------------------
def prepare_params(p, eps=1e-5):
    def taps(w):
        w = np.asarray(w, np.float32)              # (Cout, Cin, k)
        return [np.ascontiguousarray(w[:, :, j].T) for j in range(w.shape[2])]

    def fold_bn(ws, b, gamma, beta, mean, var):
        s = np.asarray(gamma, np.float32) / np.sqrt(np.asarray(var, np.float32) + eps)
        t = np.asarray(beta, np.float32) - np.asarray(mean, np.float32) * s
        return [w * s[None, :] for w in ws], b * s + t

    layers = []
    layers.append((taps(p['conv1_w']), np.asarray(p['conv1_b'], np.float32)))
    layers.append(fold_bn(taps(p['conv2_w']), np.asarray(p['conv2_b'], np.float32),
                          p['bn1_gamma'], p['bn1_beta'], p['bn1_mean'], p['bn1_var']))
    layers.append(fold_bn(taps(p['conv3_w']), np.asarray(p['conv3_b'], np.float32),
                          p['bn2_gamma'], p['bn2_beta'], p['bn2_mean'], p['bn2_var']))
    layers.append(fold_bn(taps(p['conv4_w']), np.asarray(p['conv4_b'], np.float32),
                          p['bn3_gamma'], p['bn3_beta'], p['bn3_mean'], p['bn3_var']))
    layers.append((taps(p['conv5_w']), np.asarray(p['conv5_b'], np.float32)))

    out = []
    for ws, b in layers:
        out.append(([jnp.asarray(w, jnp.bfloat16) for w in ws],      # bf16 MXU operands
                    jnp.asarray(b, jnp.float32)[None, :]))           # (1, Cout) f32 bias
    return out


def _gen_aware_vmem_limit():
    """Generation-aware VMEM budget (v7x has 64 MiB vs 128 MiB on v5e/v6e);
    leave headroom for Mosaic internal scratch.  Falls back to the compiler
    default if the query is unavailable."""
    try:
        cap = int(pltpu.get_tpu_info().vmem_capacity_bytes)
        return int(min(3 * cap // 4, cap - (16 << 20)))
    except Exception:
        return None


def _pick_batch_tile(B, L, L3, max_rows=4096):
    """Largest batch tile whose layer-1 patch matrix stays small; with more
    than one tile the 'parallel' grid axis can shard across v7x TensorCores."""
    if B * L <= max_rows:
        return B
    for cand in range(B - 1, 0, -1):
        if B % cand == 0 and cand * L <= max_rows \
                and (cand * L) % 8 == 0 and (cand * L3) % 8 == 0:
            return cand
    return B  # single tile: blocks == full arrays, always layout-legal


# ----------------------------------------------------------------------------
# Wrapper: tap-major row permutation of the input (pure layout plumbing done
# by XLA), one pallas_call over batch tiles, transpose back to (B, Cout, Lout).
# ----------------------------------------------------------------------------
def encoder_forward(x, layers, layer_seq):
    B, Cin, L = x.shape
    k1, k2, k3 = layer_seq
    kprod = k1 * k2 * k3
    assert L % kprod == 0, "sequence length must be divisible by the stride chain"
    L3 = L // kprod
    c_out = layers[-1][1].shape[-1]

    tb = _pick_batch_tile(B, L, L3)
    assert B % tb == 0
    nb = B // tb

    # Channels-last + tap-major row ordering: within each batch tile the rows
    # are ordered (j1, j2, j3, b_local, t3) so every stride-k conv's k taps are
    # the k contiguous row-chunks of its input activation.
    x_cl = jnp.transpose(x, (0, 2, 1))                                  # (B, L, Cin)
    x7 = x_cl.reshape(nb, tb, L3, k3, k2, k1, Cin)
    x_arr = jnp.transpose(x7, (0, 5, 4, 3, 1, 2, 6)).reshape(B * L, Cin)
    x_arr = x_arr.astype(jnp.bfloat16)                                  # halve input DMA

    # Specs / args (weights use a constant index_map -> stay VMEM-resident).
    in_specs = [pl.BlockSpec((tb * L, Cin), lambda i: (i, 0))]
    args = [x_arr]
    for ws, b in layers:
        for w in ws:
            in_specs.append(pl.BlockSpec(w.shape, lambda i: (0, 0)))
            args.append(w)
        in_specs.append(pl.BlockSpec(b.shape, lambda i: (0, 0)))
        args.append(b)
    out_spec = pl.BlockSpec((tb * L3, c_out), lambda i: (i, 0))

    cp_kwargs = dict(dimension_semantics=("parallel",))
    vmem_limit = _gen_aware_vmem_limit()
    if vmem_limit is not None:
        cp_kwargs["vmem_limit_bytes"] = vmem_limit

    kernel = make_encoder_kernel(tuple(len(ws) for ws, _ in layers))
    y = pl.pallas_call(
        kernel,
        out_shape=jax.ShapeDtypeStruct((B * L3, c_out), jnp.float32),
        grid=(nb,),
        in_specs=in_specs,
        out_specs=out_spec,
        compiler_params=pltpu.CompilerParams(**cp_kwargs),
    )(*args)

    # Channels-last (B*L3, Cout) back to PyTorch's (B, Cout, L3) layout.
    return jnp.transpose(y.reshape(B, L3, c_out), (0, 2, 1))


# ----------------------------------------------------------------------------
# Deterministic synthetic parameters and a pure-JAX f32 reference (eval mode).
# ----------------------------------------------------------------------------
def init_params(key, channel, layer_seq):
    ks = jax.random.split(key, 22)

    def nrm(k, shape, s=0.2):
        return (s * jax.random.normal(k, shape)).astype(jnp.float32)

    return {
        'conv1_w': nrm(ks[0], (32, channel, layer_seq[0])), 'conv1_b': nrm(ks[1], (32,)),
        'conv2_w': nrm(ks[2], (32, 32, layer_seq[1])),      'conv2_b': nrm(ks[3], (32,)),
        'conv3_w': nrm(ks[4], (64, 32, layer_seq[2])),      'conv3_b': nrm(ks[5], (64,)),
        'conv4_w': nrm(ks[6], (128, 64, 1)),                'conv4_b': nrm(ks[7], (128,)),
        'conv5_w': nrm(ks[8], (16, 128, 1)),                'conv5_b': nrm(ks[9], (16,)),
        'bn1_gamma': 1.0 + nrm(ks[10], (32,), 0.1), 'bn1_beta': nrm(ks[11], (32,), 0.1),
        'bn1_mean':  nrm(ks[12], (32,), 0.1),
        'bn1_var':   1.0 + jnp.abs(nrm(ks[13], (32,), 0.1)),
        'bn2_gamma': 1.0 + nrm(ks[14], (64,), 0.1), 'bn2_beta': nrm(ks[15], (64,), 0.1),
        'bn2_mean':  nrm(ks[16], (64,), 0.1),
        'bn2_var':   1.0 + jnp.abs(nrm(ks[17], (64,), 0.1)),
        'bn3_gamma': 1.0 + nrm(ks[18], (128,), 0.1), 'bn3_beta': nrm(ks[19], (128,), 0.1),
        'bn3_mean':  nrm(ks[20], (128,), 0.1),
        'bn3_var':   1.0 + jnp.abs(nrm(ks[21], (128,), 0.1)),
    }


def encoder_ref(x, p, layer_seq, eps=1e-5):
    """Pure-JAX (XLA) f32 reference of Encoder.forward in eval mode."""
    def conv(h, w, b, stride):
        y = jax.lax.conv_general_dilated(
            h, w, window_strides=(stride,), padding='VALID',
            dimension_numbers=('NCH', 'OIH', 'NCH'))
        return y + b[None, :, None]

    def bn(h, g, b, m, v):
        return ((h - m[None, :, None]) * jax.lax.rsqrt(v[None, :, None] + eps)
                * g[None, :, None] + b[None, :, None])

    def lrelu(h):
        return jnp.where(h > 0, h, 0.2 * h)

    h = lrelu(conv(x, p['conv1_w'], p['conv1_b'], layer_seq[0]))
    h = lrelu(bn(conv(h, p['conv2_w'], p['conv2_b'], layer_seq[1]),
                 p['bn1_gamma'], p['bn1_beta'], p['bn1_mean'], p['bn1_var']))
    h = lrelu(bn(conv(h, p['conv3_w'], p['conv3_b'], layer_seq[2]),
                 p['bn2_gamma'], p['bn2_beta'], p['bn2_mean'], p['bn2_var']))
    h = lrelu(bn(conv(h, p['conv4_w'], p['conv4_b'], 1),
                 p['bn3_gamma'], p['bn3_beta'], p['bn3_mean'], p['bn3_var']))
    return jnp.tanh(conv(h, p['conv5_w'], p['conv5_b'], 1))


if __name__ == "__main__":
    channel = 4
    seq_len = 64
    layer_seq = (2, 2, 2)       # kernel == stride for conv1..3; L_out = 8
    batch = 2

    key = jax.random.PRNGKey(0)
    k_x, k_p = jax.random.split(key)
    x = jax.random.normal(k_x, (batch, channel, seq_len), dtype=jnp.float32)

    params = init_params(k_p, channel, layer_seq)
    layers = prepare_params(params)

    y = encoder_forward(x, layers, layer_seq)
    y = jax.block_until_ready(y)

    L_out = seq_len // (layer_seq[0] * layer_seq[1] * layer_seq[2])
    assert y.shape == (batch, 16, L_out) and y.dtype == jnp.float32

    # Correctness vs. the f32 reference (bf16 matmul operands -> loosened tol).
    y_ref = jax.block_until_ready(encoder_ref(x, params, layer_seq))
    np.testing.assert_allclose(np.asarray(y), np.asarray(y_ref),
                               rtol=3e-2, atol=3e-2)

    print("KERNEL_OK")
</pallas_src>

<mosaic_0001>
module attributes {stable_mosaic.version = 11 : i64} {
  func.func @kernel(%arg0: i32, %arg1: memref<128x4xbf16, #tpu.memory_space<vmem>>, %arg2: memref<4x32xbf16, #tpu.memory_space<vmem>>, %arg3: memref<4x32xbf16, #tpu.memory_space<vmem>>, %arg4: memref<1x32xf32, #tpu.memory_space<vmem>>, %arg5: memref<32x32xbf16, #tpu.memory_space<vmem>>, %arg6: memref<32x32xbf16, #tpu.memory_space<vmem>>, %arg7: memref<1x32xf32, #tpu.memory_space<vmem>>, %arg8: memref<32x64xbf16, #tpu.memory_space<vmem>>, %arg9: memref<32x64xbf16, #tpu.memory_space<vmem>>, %arg10: memref<1x64xf32, #tpu.memory_space<vmem>>, %arg11: memref<64x128xbf16, #tpu.memory_space<vmem>>, %arg12: memref<1x128xf32, #tpu.memory_space<vmem>>, %arg13: memref<128x16xbf16, #tpu.memory_space<vmem>>, %arg14: memref<1x16xf32, #tpu.memory_space<vmem>>, %arg15: memref<16x16xf32, #tpu.memory_space<vmem>>) attributes {dimension_semantics = [#tpu.dimension_semantics<parallel>], iteration_bounds = array<i64: 1>, scalar_prefetch = 0 : i64, scratch_operands = 0 : i64, tpu.core_type = #tpu.core_type<tc>, window_params = [{transform_indices = @transform_0, window_bounds = array<i64: 128, 4>}, {pipeline_mode = #tpu.pipeline_mode<synchronous>, transform_indices = @transform_1, window_bounds = array<i64: 4, 32>}, {pipeline_mode = #tpu.pipeline_mode<synchronous>, transform_indices = @transform_2, window_bounds = array<i64: 4, 32>}, {pipeline_mode = #tpu.pipeline_mode<synchronous>, transform_indices = @transform_3, window_bounds = array<i64: 1, 32>}, {pipeline_mode = #tpu.pipeline_mode<synchronous>, transform_indices = @transform_4, window_bounds = array<i64: 32, 32>}, {pipeline_mode = #tpu.pipeline_mode<synchronous>, transform_indices = @transform_5, window_bounds = array<i64: 32, 32>}, {pipeline_mode = #tpu.pipeline_mode<synchronous>, transform_indices = @transform_6, window_bounds = array<i64: 1, 32>}, {pipeline_mode = #tpu.pipeline_mode<synchronous>, transform_indices = @transform_7, window_bounds = array<i64: 32, 64>}, {pipeline_mode = #tpu.pipeline_mode<synchronous>, transform_indices = @transform_8, window_bounds = array<i64: 32, 64>}, {pipeline_mode = #tpu.pipeline_mode<synchronous>, transform_indices = @transform_9, window_bounds = array<i64: 1, 64>}, {pipeline_mode = #tpu.pipeline_mode<synchronous>, transform_indices = @transform_10, window_bounds = array<i64: 64, 128>}, {pipeline_mode = #tpu.pipeline_mode<synchronous>, transform_indices = @transform_11, window_bounds = array<i64: 1, 128>}, {pipeline_mode = #tpu.pipeline_mode<synchronous>, transform_indices = @transform_12, window_bounds = array<i64: 128, 16>}, {pipeline_mode = #tpu.pipeline_mode<synchronous>, transform_indices = @transform_13, window_bounds = array<i64: 1, 16>}, {transform_indices = @transform_14, window_bounds = array<i64: 16, 16>}]} {
    %c0 = arith.constant 0 : index
    %c0_0 = arith.constant 0 : index
    %0 = vector.load %arg1[%c0, %c0_0] : memref<128x4xbf16, #tpu.memory_space<vmem>>, vector<128x4xbf16>
    %1 = vector.extract_strided_slice %0 {offsets = [0, 0], sizes = [64, 4], strides = [1, 1]} : vector<128x4xbf16> to vector<64x4xbf16>
    %c0_1 = arith.constant 0 : index
    %c0_2 = arith.constant 0 : index
    %2 = vector.load %arg2[%c0_1, %c0_2] : memref<4x32xbf16, #tpu.memory_space<vmem>>, vector<4x32xbf16>
    %cst = arith.constant dense<0.000000e+00> : vector<64x32xf32>
    %3 = tpu.matmul %1, %2, %cst {dimension_numbers = #tpu.dot_dimension_numbers<[1], [0], [0], [1], [0, 0, 1, 1], [], []>} : vector<64x4xbf16>, vector<4x32xbf16>, vector<64x32xf32> -> vector<64x32xf32>
    %4 = vector.extract_strided_slice %0 {offsets = [64, 0], sizes = [64, 4], strides = [1, 1]} : vector<128x4xbf16> to vector<64x4xbf16>
    %c0_3 = arith.constant 0 : index
    %c0_4 = arith.constant 0 : index
    %5 = vector.load %arg3[%c0_3, %c0_4] : memref<4x32xbf16, #tpu.memory_space<vmem>>, vector<4x32xbf16>
    %cst_5 = arith.constant dense<0.000000e+00> : vector<64x32xf32>
    %6 = tpu.matmul %4, %5, %cst_5 {dimension_numbers = #tpu.dot_dimension_numbers<[1], [0], [0], [1], [0, 0, 1, 1], [], []>} : vector<64x4xbf16>, vector<4x32xbf16>, vector<64x32xf32> -> vector<64x32xf32>
    %7 = arith.addf %3, %6 : vector<64x32xf32>
    %c0_6 = arith.constant 0 : index
    %c0_7 = arith.constant 0 : index
    %8 = vector.load %arg4[%c0_6, %c0_7] : memref<1x32xf32, #tpu.memory_space<vmem>>, vector<1x32xf32>
    %9 = vector.broadcast %8 : vector<1x32xf32> to vector<64x32xf32>
    %10 = arith.addf %7, %9 : vector<64x32xf32>
    %cst_8 = arith.constant 2.000000e-01 : f32
    %11 = vector.broadcast %cst_8 : f32 to vector<64x32xf32>
    %12 = arith.mulf %11, %10 : vector<64x32xf32>
    %13 = arith.maximumf %10, %12 : vector<64x32xf32>
    %14 = arith.truncf %13 : vector<64x32xf32> to vector<64x32xbf16>
    %15 = vector.extract_strided_slice %14 {offsets = [0, 0], sizes = [32, 32], strides = [1, 1]} : vector<64x32xbf16> to vector<32x32xbf16>
    %c0_9 = arith.constant 0 : index
    %c0_10 = arith.constant 0 : index
    %16 = vector.load %arg5[%c0_9, %c0_10] : memref<32x32xbf16, #tpu.memory_space<vmem>>, vector<32x32xbf16>
    %cst_11 = arith.constant dense<0.000000e+00> : vector<32x32xf32>
    %17 = tpu.matmul %15, %16, %cst_11 {dimension_numbers = #tpu.dot_dimension_numbers<[1], [0], [0], [1], [0, 0, 1, 1], [], []>} : vector<32x32xbf16>, vector<32x32xbf16>, vector<32x32xf32> -> vector<32x32xf32>
    %18 = vector.extract_strided_slice %14 {offsets = [32, 0], sizes = [32, 32], strides = [1, 1]} : vector<64x32xbf16> to vector<32x32xbf16>
    %c0_12 = arith.constant 0 : index
    %c0_13 = arith.constant 0 : index
    %19 = vector.load %arg6[%c0_12, %c0_13] : memref<32x32xbf16, #tpu.memory_space<vmem>>, vector<32x32xbf16>
    %cst_14 = arith.constant dense<0.000000e+00> : vector<32x32xf32>
    %20 = tpu.matmul %18, %19, %cst_14 {dimension_numbers = #tpu.dot_dimension_numbers<[1], [0], [0], [1], [0, 0, 1, 1], [], []>} : vector<32x32xbf16>, vector<32x32xbf16>, vector<32x32xf32> -> vector<32x32xf32>
    %21 = arith.addf %17, %20 : vector<32x32xf32>
    %c0_15 = arith.constant 0 : index
    %c0_16 = arith.constant 0 : index
    %22 = vector.load %arg7[%c0_15, %c0_16] : memref<1x32xf32, #tpu.memory_space<vmem>>, vector<1x32xf32>
    %23 = vector.broadcast %22 : vector<1x32xf32> to vector<32x32xf32>
    %24 = arith.addf %21, %23 : vector<32x32xf32>
    %cst_17 = arith.constant 2.000000e-01 : f32
    %25 = vector.broadcast %cst_17 : f32 to vector<32x32xf32>
    %26 = arith.mulf %25, %24 : vector<32x32xf32>
    %27 = arith.maximumf %24, %26 : vector<32x32xf32>
    %28 = arith.truncf %27 : vector<32x32xf32> to vector<32x32xbf16>
    %29 = vector.extract_strided_slice %28 {offsets = [0, 0], sizes = [16, 32], strides = [1, 1]} : vector<32x32xbf16> to vector<16x32xbf16>
    %c0_18 = arith.constant 0 : index
    %c0_19 = arith.constant 0 : index
    %30 = vector.load %arg8[%c0_18, %c0_19] : memref<32x64xbf16, #tpu.memory_space<vmem>>, vector<32x64xbf16>
    %cst_20 = arith.constant dense<0.000000e+00> : vector<16x64xf32>
    %31 = tpu.matmul %29, %30, %cst_20 {dimension_numbers = #tpu.dot_dimension_numbers<[1], [0], [0], [1], [0, 0, 1, 1], [], []>} : vector<16x32xbf16>, vector<32x64xbf16>, vector<16x64xf32> -> vector<16x64xf32>
    %32 = vector.extract_strided_slice %28 {offsets = [16, 0], sizes = [16, 32], strides = [1, 1]} : vector<32x32xbf16> to vector<16x32xbf16>
    %c0_21 = arith.constant 0 : index
    %c0_22 = arith.constant 0 : index
    %33 = vector.load %arg9[%c0_21, %c0_22] : memref<32x64xbf16, #tpu.memory_space<vmem>>, vector<32x64xbf16>
    %cst_23 = arith.constant dense<0.000000e+00> : vector<16x64xf32>
    %34 = tpu.matmul %32, %33, %cst_23 {dimension_numbers = #tpu.dot_dimension_numbers<[1], [0], [0], [1], [0, 0, 1, 1], [], []>} : vector<16x32xbf16>, vector<32x64xbf16>, vector<16x64xf32> -> vector<16x64xf32>
    %35 = arith.addf %31, %34 : vector<16x64xf32>
    %c0_24 = arith.constant 0 : index
    %c0_25 = arith.constant 0 : index
    %36 = vector.load %arg10[%c0_24, %c0_25] : memref<1x64xf32, #tpu.memory_space<vmem>>, vector<1x64xf32>
    %37 = vector.broadcast %36 : vector<1x64xf32> to vector<16x64xf32>
    %38 = arith.addf %35, %37 : vector<16x64xf32>
    %cst_26 = arith.constant 2.000000e-01 : f32
    %39 = vector.broadcast %cst_26 : f32 to vector<16x64xf32>
    %40 = arith.mulf %39, %38 : vector<16x64xf32>
    %41 = arith.maximumf %38, %40 : vector<16x64xf32>
    %42 = arith.truncf %41 : vector<16x64xf32> to vector<16x64xbf16>
    %c0_27 = arith.constant 0 : index
    %c0_28 = arith.constant 0 : index
    %43 = vector.load %arg11[%c0_27, %c0_28] : memref<64x128xbf16, #tpu.memory_space<vmem>>, vector<64x128xbf16>
    %cst_29 = arith.constant dense<0.000000e+00> : vector<16x128xf32>
    %44 = tpu.matmul %42, %43, %cst_29 {dimension_numbers = #tpu.dot_dimension_numbers<[1], [0], [0], [1], [0, 0, 1, 1], [], []>} : vector<16x64xbf16>, vector<64x128xbf16>, vector<16x128xf32> -> vector<16x128xf32>
    %c0_30 = arith.constant 0 : index
    %c0_31 = arith.constant 0 : index
    %45 = vector.load %arg12[%c0_30, %c0_31] : memref<1x128xf32, #tpu.memory_space<vmem>>, vector<1x128xf32>
    %46 = vector.broadcast %45 : vector<1x128xf32> to vector<16x128xf32>
    %47 = arith.addf %44, %46 : vector<16x128xf32>
    %cst_32 = arith.constant 2.000000e-01 : f32
    %48 = vector.broadcast %cst_32 : f32 to vector<16x128xf32>
    %49 = arith.mulf %48, %47 : vector<16x128xf32>
    %50 = arith.maximumf %47, %49 : vector<16x128xf32>
    %51 = arith.truncf %50 : vector<16x128xf32> to vector<16x128xbf16>
    %c0_33 = arith.constant 0 : index
    %c0_34 = arith.constant 0 : index
    %52 = vector.load %arg13[%c0_33, %c0_34] : memref<128x16xbf16, #tpu.memory_space<vmem>>, vector<128x16xbf16>
    %cst_35 = arith.constant dense<0.000000e+00> : vector<16x16xf32>
    %53 = tpu.matmul %51, %52, %cst_35 {dimension_numbers = #tpu.dot_dimension_numbers<[1], [0], [0], [1], [0, 0, 1, 1], [], []>} : vector<16x128xbf16>, vector<128x16xbf16>, vector<16x16xf32> -> vector<16x16xf32>
    %c0_36 = arith.constant 0 : index
    %c0_37 = arith.constant 0 : index
    %54 = vector.load %arg14[%c0_36, %c0_37] : memref<1x16xf32, #tpu.memory_space<vmem>>, vector<1x16xf32>
    %55 = vector.broadcast %54 : vector<1x16xf32> to vector<16x16xf32>
    %56 = arith.addf %53, %55 : vector<16x16xf32>
    %57 = math.tanh %56 : vector<16x16xf32>
    %c0_38 = arith.constant 0 : index
    %c0_39 = arith.constant 0 : index
    %58 = vector.load %arg15[%c0_38, %c0_39] : memref<16x16xf32, #tpu.memory_space<vmem>>, vector<16x16xf32>
    tpu.vector_store %arg15[%c0_38, %c0_39], %57 {strides = array<i32>} : memref<16x16xf32, #tpu.memory_space<vmem>>, vector<16x16xf32>,
    return
  }
  func.func @transform_0(%arg0: i32) -> (i32, i32) {
    %c0_i32 = arith.constant 0 : i32
    %c0_i32_0 = arith.constant 0 : i32
    return %arg0, %c0_i32 : i32, i32
  }
  func.func @transform_1(%arg0: i32) -> (i32, i32) {
    %c0_i32 = arith.constant 0 : i32
    %c0_i32_0 = arith.constant 0 : i32
    %c0_i32_1 = arith.constant 0 : i32
    return %c0_i32, %c0_i32_0 : i32, i32
  }
  func.func @transform_2(%arg0: i32) -> (i32, i32) {
    %c0_i32 = arith.constant 0 : i32
    %c0_i32_0 = arith.constant 0 : i32
    %c0_i32_1 = arith.constant 0 : i32
    return %c0_i32, %c0_i32_0 : i32, i32
  }
  func.func @transform_3(%arg0: i32) -> (i32, i32) {
    %c0_i32 = arith.constant 0 : i32
    %c0_i32_0 = arith.constant 0 : i32
    %c0_i32_1 = arith.constant 0 : i32
    return %c0_i32, %c0_i32_0 : i32, i32
  }
  func.func @transform_4(%arg0: i32) -> (i32, i32) {
    %c0_i32 = arith.constant 0 : i32
    %c0_i32_0 = arith.constant 0 : i32
    %c0_i32_1 = arith.constant 0 : i32
    return %c0_i32, %c0_i32_0 : i32, i32
  }
  func.func @transform_5(%arg0: i32) -> (i32, i32) {
    %c0_i32 = arith.constant 0 : i32
    %c0_i32_0 = arith.constant 0 : i32
    %c0_i32_1 = arith.constant 0 : i32
    return %c0_i32, %c0_i32_0 : i32, i32
  }
  func.func @transform_6(%arg0: i32) -> (i32, i32) {
    %c0_i32 = arith.constant 0 : i32
    %c0_i32_0 = arith.constant 0 : i32
    %c0_i32_1 = arith.constant 0 : i32
    return %c0_i32, %c0_i32_0 : i32, i32
  }
  func.func @transform_7(%arg0: i32) -> (i32, i32) {
    %c0_i32 = arith.constant 0 : i32
    %c0_i32_0 = arith.constant 0 : i32
    %c0_i32_1 = arith.constant 0 : i32
    return %c0_i32, %c0_i32_0 : i32, i32
  }
  func.func @transform_8(%arg0: i32) -> (i32, i32) {
    %c0_i32 = arith.constant 0 : i32
    %c0_i32_0 = arith.constant 0 : i32
    %c0_i32_1 = arith.constant 0 : i32
    return %c0_i32, %c0_i32_0 : i32, i32
  }
  func.func @transform_9(%arg0: i32) -> (i32, i32) {
    %c0_i32 = arith.constant 0 : i32
    %c0_i32_0 = arith.constant 0 : i32
    %c0_i32_1 = arith.constant 0 : i32
    return %c0_i32, %c0_i32_0 : i32, i32
  }
  func.func @transform_10(%arg0: i32) -> (i32, i32) {
    %c0_i32 = arith.constant 0 : i32
    %c0_i32_0 = arith.constant 0 : i32
    %c0_i32_1 = arith.constant 0 : i32
    return %c0_i32, %c0_i32_0 : i32, i32
  }
  func.func @transform_11(%arg0: i32) -> (i32, i32) {
    %c0_i32 = arith.constant 0 : i32
    %c0_i32_0 = arith.constant 0 : i32
    %c0_i32_1 = arith.constant 0 : i32
    return %c0_i32, %c0_i32_0 : i32, i32
  }
  func.func @transform_12(%arg0: i32) -> (i32, i32) {
    %c0_i32 = arith.constant 0 : i32
    %c0_i32_0 = arith.constant 0 : i32
    %c0_i32_1 = arith.constant 0 : i32
    return %c0_i32, %c0_i32_0 : i32, i32
  }
  func.func @transform_13(%arg0: i32) -> (i32, i32) {
    %c0_i32 = arith.constant 0 : i32
    %c0_i32_0 = arith.constant 0 : i32
    %c0_i32_1 = arith.constant 0 : i32
    return %c0_i32, %c0_i32_0 : i32, i32
  }
  func.func @transform_14(%arg0: i32) -> (i32, i32) {
    %c0_i32 = arith.constant 0 : i32
    %c0_i32_0 = arith.constant 0 : i32
    return %arg0, %c0_i32 : i32, i32
  }
}

</mosaic_0001>

<llo_original>
// kernel: tpu_custom_call.1
$region0: #{tpu_custom_call.1}
  #allocation0 [shape = 'u32[]', space=smem, size = 0x4, offset = 0x4, fixed_abs, tag = 'smem constant byte address 0x4 - core index']
  #allocation1 [shape = 'u32[144,128]{1,0:T(1,128)}', space=vmem, size = 0x12000, scoped, tag = 'internal scratch']
  %s0 = inlined_call_operand.vmem [shape: bf16[128,4], index: 0, kind: input, shape index: {}]
  %s1 = inlined_call_operand.vmem [shape: bf16[4,32], index: 1, kind: input, shape index: {}]
  %s2 = inlined_call_operand.vmem [shape: bf16[4,32], index: 2, kind: input, shape index: {}]
  %s3 = inlined_call_operand.vmem [shape: f32[1,32], index: 3, kind: input, shape index: {}]
  %s4 = inlined_call_operand.vmem [shape: bf16[32,32], index: 4, kind: input, shape index: {}]
  %s5 = inlined_call_operand.vmem [shape: bf16[32,32], index: 5, kind: input, shape index: {}]
  %s6 = inlined_call_operand.vmem [shape: f32[1,32], index: 6, kind: input, shape index: {}]
  %s7 = inlined_call_operand.vmem [shape: bf16[32,64], index: 7, kind: input, shape index: {}]
  %s8 = inlined_call_operand.vmem [shape: bf16[32,64], index: 8, kind: input, shape index: {}]
  %s9 = inlined_call_operand.vmem [shape: f32[1,64], index: 9, kind: input, shape index: {}]
  %s10 = inlined_call_operand.vmem [shape: bf16[64,128], index: 10, kind: input, shape index: {}]
  %s11 = inlined_call_operand.vmem [shape: f32[1,128], index: 11, kind: input, shape index: {}]
  %s12 = inlined_call_operand.vmem [shape: bf16[128,16], index: 12, kind: input, shape index: {}]
  %s13 = inlined_call_operand.vmem [shape: f32[1,16], index: 13, kind: input, shape index: {}]
  %s14 = inlined_call_operand.hbm [shape: f32[16,16], index: 14, kind: output, shape index: {}]
  %s15 = sld [smem:[#allocation0]]
  $region66: #{tpu_custom_call.1} parent=0
    _
  %s17 = ssub.s32 1, %s15
  %s18 = scalar_select 0, %s17, %s15
  $region1: #{tpu_custom_call.1} parent=0
    #allocation2 [shape = 'u8[8192]{0}', space=vmem, size = 0x2000, scoped, tag = 'output window, operand 0, single buffered']
    #allocation3 [shape = 's32[1]{0}', space=sflag, size = 0x4, scoped, tag = 'scoped memory for tpu_custom_call.1']
    %19 = vsyncpa [#allocation3], 0
    // Predicated region
    $region2: #{tpu_custom_call.1} parent=1 // pred_check
      _
    $region3: #{tpu_custom_call.1} parent=1 // pred_check_branch
      %21 = sbr.rel (0) target = $region5
    $region4: #{tpu_custom_call.1} parent=1 // pred_region
      _
    $region5: #{tpu_custom_call.1} parent=1 // pred_fallthru
      _
    // Predicated region
    $region6: #{tpu_custom_call.1} parent=1 // pred_check
      _
    $region7: #{tpu_custom_call.1} parent=1 // pred_check_branch
      %23 = sbr.rel (0) target = $region9
    $region8: #{tpu_custom_call.1} parent=1 // pred_region
      _
    $region9: #{tpu_custom_call.1} parent=1 // pred_fallthru
      _
    // Predicated region
    $region10: #{tpu_custom_call.1} parent=1 // pred_check
      _
    $region11: #{tpu_custom_call.1} parent=1 // pred_check_branch
      %25 = sbr.rel (0) target = $region13
    $region12: #{tpu_custom_call.1} parent=1 // pred_region
      _
    $region13: #{tpu_custom_call.1} parent=1 // pred_fallthru
      _
    // Predicated region
    $region14: #{tpu_custom_call.1} parent=1 // pred_check
      _
    $region15: #{tpu_custom_call.1} parent=1 // pred_check_branch
      %27 = sbr.rel (0) target = $region17
    $region16: #{tpu_custom_call.1} parent=1 // pred_region
      _
    $region17: #{tpu_custom_call.1} parent=1 // pred_fallthru
      _
    // Predicated region
    $region18: #{tpu_custom_call.1} parent=1 // pred_check
      _
    $region19: #{tpu_custom_call.1} parent=1 // pred_check_branch
      %29 = sbr.rel (0) target = $region21
    $region20: #{tpu_custom_call.1} parent=1 // pred_region
      _
    $region21: #{tpu_custom_call.1} parent=1 // pred_fallthru
      _
    // Predicated region
    $region22: #{tpu_custom_call.1} parent=1 // pred_check
      _
    $region23: #{tpu_custom_call.1} parent=1 // pred_check_branch
      %31 = sbr.rel (0) target = $region25
    $region24: #{tpu_custom_call.1} parent=1 // pred_region
      _
    $region25: #{tpu_custom_call.1} parent=1 // pred_fallthru
      _
    // Predicated region
    $region26: #{tpu_custom_call.1} parent=1 // pred_check
      _
    $region27: #{tpu_custom_call.1} parent=1 // pred_check_branch
      %33 = sbr.rel (0) target = $region29
    $region28: #{tpu_custom_call.1} parent=1 // pred_region
      _
    $region29: #{tpu_custom_call.1} parent=1 // pred_fallthru
      _
    // Predicated region
    $region30: #{tpu_custom_call.1} parent=1 // pred_check
      _
    $region31: #{tpu_custom_call.1} parent=1 // pred_check_branch
      %35 = sbr.rel (0) target = $region33
    $region32: #{tpu_custom_call.1} parent=1 // pred_region
      _
    $region33: #{tpu_custom_call.1} parent=1 // pred_fallthru
      _
    // Predicated region
    $region34: #{tpu_custom_call.1} parent=1 // pred_check
      _
    $region35: #{tpu_custom_call.1} parent=1 // pred_check_branch
      %37 = sbr.rel (0) target = $region37
    $region36: #{tpu_custom_call.1} parent=1 // pred_region
      _
    $region37: #{tpu_custom_call.1} parent=1 // pred_fallthru
      _
    // Predicated region
    $region38: #{tpu_custom_call.1} parent=1 // pred_check
      _
    $region39: #{tpu_custom_call.1} parent=1 // pred_check_branch
      %39 = sbr.rel (0) target = $region41
    $region40: #{tpu_custom_call.1} parent=1 // pred_region
      _
    $region41: #{tpu_custom_call.1} parent=1 // pred_fallthru
      _
    // Predicated region
    $region42: #{tpu_custom_call.1} parent=1 // pred_check
      _
    $region43: #{tpu_custom_call.1} parent=1 // pred_check_branch
      %41 = sbr.rel (0) target = $region45
    $region44: #{tpu_custom_call.1} parent=1 // pred_region
      _
    $region45: #{tpu_custom_call.1} parent=1 // pred_fallthru
      _
    // Predicated region
    $region46: #{tpu_custom_call.1} parent=1 // pred_check
      _
    $region47: #{tpu_custom_call.1} parent=1 // pred_check_branch
      %43 = sbr.rel (0) target = $region49
    $region48: #{tpu_custom_call.1} parent=1 // pred_region
      _
    $region49: #{tpu_custom_call.1} parent=1 // pred_fallthru
      _
    // Predicated region
    $region50: #{tpu_custom_call.1} parent=1 // pred_check
      _
    $region51: #{tpu_custom_call.1} parent=1 // pred_check_branch
      %45 = sbr.rel (0) target = $region53
    $region52: #{tpu_custom_call.1} parent=1 // pred_region
      _
    $region53: #{tpu_custom_call.1} parent=1 // pred_fallthru
      _
    // Predicated region
    $region54: #{tpu_custom_call.1} parent=1 // pred_check
      _
    $region55: #{tpu_custom_call.1} parent=1 // pred_check_branch
      %47 = sbr.rel (0) target = $region57
    $region56: #{tpu_custom_call.1} parent=1 // pred_region
      _
    $region57: #{tpu_custom_call.1} parent=1 // pred_fallthru
      _
    %v49 = vld [vmem:[%s0] sm:$0xf]
    %v50 = vld [vmem:[%s0 + $0x4] sm:$0xf]
    %v51 = vld [vmem:[%s0 + $0x8] sm:$0xf]
    %v52 = vld [vmem:[%s0 + $0xc] sm:$0xf]
    %v53 = vld [vmem:[%s0 + $0x10] sm:$0xf]
    %v54 = vld [vmem:[%s0 + $0x14] sm:$0xf]
    %v55 = vld [vmem:[%s0 + $0x18] sm:$0xf]
    %v56 = vld [vmem:[%s0 + $0x1c] sm:$0xf]
    %v57 = vld [vmem:[%s0 + $0x20] sm:$0xf]
    %v58 = vld [vmem:[%s0 + $0x24] sm:$0xf]
    %v59 = vld [vmem:[%s0 + $0x28] sm:$0xf]
    %v60 = vld [vmem:[%s0 + $0x2c] sm:$0xf]
    %v61 = vld [vmem:[%s0 + $0x30] sm:$0xf]
    %v62 = vld [vmem:[%s0 + $0x34] sm:$0xf]
    %v63 = vld [vmem:[%s0 + $0x38] sm:$0xf]
    %v64 = vld [vmem:[%s0 + $0x3c] sm:$0xf]
    %v65 = vld [vmem:[%s1] sm:$0x3]
    %v66 = vld [vmem:[%s2] sm:$0x3]
    %v75 = vunpack.c.l.b16 %v57
    %v76 = vunpack.c.l.b16 %v58
    %v77 = vunpack.c.l.b16 %v59
    %v78 = vunpack.c.l.b16 %v60
    %v79 = vunpack.c.l.b16 %v61
    %v80 = vunpack.c.l.b16 %v62
    %v81 = vunpack.c.l.b16 %v63
    %v82 = vunpack.c.l.b16 %v64
    %v83 = vpack.c.b16 %v76, %v75
    %v84 = vpack.c.b16 %v78, %v77
    %v85 = vpack.c.b16 %v80, %v79
    %v86 = vpack.c.b16 %v82, %v81
    %vm87 = vcmask 31744
    %v89 = vsel %vm87, %v83, 0
    %v92 = vsel %vm87, %v84, 0
    %v95 = vsel %vm87, %v85, 0
    %v98 = vsel %vm87, %v86, 0
    %vm100 = vcmask 1041408
    %v102 = vsel %vm100, %v66, 0
    %104 = vmatprep.subr.bf16.mxu0 0
    %105 = vmatpush1.bf16.msra.mxu0 %v102
    %106 = vmatprep.subr.bf16.mxu0 0
    %107 = vmatpush1.bf16.msra.mxu0 0
    %108 = vmatprep.subr.bf16.mxu0 0
    %109 = vmatpush1.bf16.msra.mxu0 0
    %110 = vmatprep.subr.bf16.mxu0 0
    %111 = vmatpush1.bf16.msra.mxu0 0
    %112 = vmatprep.subr.bf16.mxu0 0
    %113 = vmatpush1.bf16.msra.mxu0 0
    %114 = vmatprep.subr.bf16.mxu0 0
    %115 = vmatpush1.bf16.msra.mxu0 0
    %116 = vmatprep.subr.bf16.mxu0 0
    %117 = vmatpush1.bf16.msra.mxu0 0
    %118 = vmatprep.subr.bf16.mxu0 0
    %119 = vmatpush1.bf16.msra.mxu0 0
    %120 = vmatprep.subr.bf16.mxu0 0
    %121 = vmatpush1.bf16.msra.mxu0 0
    %122 = vmatprep.subr.bf16.mxu0 0
    %123 = vmatpush1.bf16.msra.mxu0 0
    %124 = vmatprep.subr.bf16.mxu0 0
    %125 = vmatpush1.bf16.msra.mxu0 0
    %126 = vmatprep.subr.bf16.mxu0 0
    %127 = vmatpush1.bf16.msra.mxu0 0
    %128 = vmatprep.subr.bf16.mxu0 0
    %129 = vmatpush1.bf16.msra.mxu0 0
    %130 = vmatprep.subr.bf16.mxu0 0
    %131 = vmatpush1.bf16.msra.mxu0 0
    %132 = vmatprep.subr.bf16.mxu0 0
    %133 = vmatpush1.bf16.msra.mxu0 0
    %134 = vmatprep.subr.bf16.mxu0 0
    %135 = vmatpush1.bf16.msra.mxu0 0
    %136 = vmatprep.mubr.bf16.mxu0 0
    %137 = vmatmul.mubr.bf16.gmra.mrb[0].mxu0 %v89
    %v138 = vpop.f32.mrb[0].mxu0
    %v139 = vadd.f32 0.0, %v138
    %v140 = vpop.f32.mrb[0].mxu0
    %v141 = vpop.f32.mrb[0].mxu0
    %v142 = vadd.f32 0.0, %v141
    %v143 = vpop.f32.mrb[0].mxu0
    %144 = vmatprep.mubr.bf16.mxu0 0
    %145 = vmatmul.mubr.bf16.gmra.mrb[0].mxu0 %v92
    %v146 = vpop.f32.mrb[0].mxu0
    %v147 = vadd.f32 0.0, %v146
    %v148 = vpop.f32.mrb[0].mxu0
    %v149 = vpop.f32.mrb[0].mxu0
    %v150 = vadd.f32 0.0, %v149
    %v151 = vpop.f32.mrb[0].mxu0
    %152 = vmatprep.mubr.bf16.mxu0 0
    %153 = vmatmul.mubr.bf16.gmra.mrb[0].mxu0 %v95
    %v154 = vpop.f32.mrb[0].mxu0
    %v155 = vadd.f32 0.0, %v154
    %v156 = vpop.f32.mrb[0].mxu0
    %v157 = vpop.f32.mrb[0].mxu0
    %v158 = vadd.f32 0.0, %v157
    %v159 = vpop.f32.mrb[0].mxu0
    %160 = vmatprep.mubr.bf16.mxu0 0
    %161 = vmatmul.mubr.bf16.gmra.mrb[0].mxu0 %v98
    %v162 = vpop.f32.mrb[0].mxu0
    %v163 = vadd.f32 0.0, %v162
    %v164 = vpop.f32.mrb[0].mxu0
    %v165 = vpop.f32.mrb[0].mxu0
    %v166 = vadd.f32 0.0, %v165
    %v167 = vpop.f32.mrb[0].mxu0
    %168 = vdwg.mxu0
    %v177 = vunpack.c.l.b16 %v49
    %v178 = vunpack.c.l.b16 %v50
    %v179 = vunpack.c.l.b16 %v51
    %v180 = vunpack.c.l.b16 %v52
    %v181 = vunpack.c.l.b16 %v53
    %v182 = vunpack.c.l.b16 %v54
    %v183 = vunpack.c.l.b16 %v55
    %v184 = vunpack.c.l.b16 %v56
    %v185 = vpack.c.b16 %v178, %v177
    %v186 = vpack.c.b16 %v180, %v179
    %v187 = vpack.c.b16 %v182, %v181
    %v188 = vpack.c.b16 %v184, %v183
    %v190 = vsel %vm87, %v185, 0
    %v193 = vsel %vm87, %v186, 0
    %v196 = vsel %vm87, %v187, 0
    %v199 = vsel %vm87, %v188, 0
    %v202 = vsel %vm100, %v65, 0
    %204 = vmatprep.subr.bf16.mxu0 0
    %205 = vmatpush1.bf16.msra.mxu0 %v202
    %206 = vmatprep.subr.bf16.mxu0 0
    %207 = vmatpush1.bf16.msra.mxu0 0
    %208 = vmatprep.subr.bf16.mxu0 0
    %209 = vmatpush1.bf16.msra.mxu0 0
    %210 = vmatprep.subr.bf16.mxu0 0
    %211 = vmatpush1.bf16.msra.mxu0 0
    %212 = vmatprep.subr.bf16.mxu0 0
    %213 = vmatpush1.bf16.msra.mxu0 0
    %214 = vmatprep.subr.bf16.mxu0 0
    %215 = vmatpush1.bf16.msra.mxu0 0
    %216 = vmatprep.subr.bf16.mxu0 0
    %217 = vmatpush1.bf16.msra.mxu0 0
    %218 = vmatprep.subr.bf16.mxu0 0
    %219 = vmatpush1.bf16.msra.mxu0 0
    %220 = vmatprep.subr.bf16.mxu0 0
    %221 = vmatpush1.bf16.msra.mxu0 0
    %222 = vmatprep.subr.bf16.mxu0 0
    %223 = vmatpush1.bf16.msra.mxu0 0
    %224 = vmatprep.subr.bf16.mxu0 0
    %225 = vmatpush1.bf16.msra.mxu0 0
    %226 = vmatprep.subr.bf16.mxu0 0
    %227 = vmatpush1.bf16.msra.mxu0 0
    %228 = vmatprep.subr.bf16.mxu0 0
    %229 = vmatpush1.bf16.msra.mxu0 0
    %230 = vmatprep.subr.bf16.mxu0 0
    %231 = vmatpush1.bf16.msra.mxu0 0
    %232 = vmatprep.subr.bf16.mxu0 0
    %233 = vmatpush1.bf16.msra.mxu0 0
    %234 = vmatprep.subr.bf16.mxu0 0
    %235 = vmatpush1.bf16.msra.mxu0 0
    %236 = vmatprep.mubr.bf16.mxu0 0
    %237 = vmatmul.mubr.bf16.gmra.mrb[0].mxu0 %v190
    %v238 = vpop.f32.mrb[0].mxu0
    %v239 = vadd.f32 %v139, %v238
    %v240 = vpop.f32.mrb[0].mxu0
    %v241 = vpop.f32.mrb[0].mxu0
    %v242 = vadd.f32 %v142, %v241
    %v243 = vpop.f32.mrb[0].mxu0
    %244 = vmatprep.mubr.bf16.mxu0 0
    %245 = vmatmul.mubr.bf16.gmra.mrb[0].mxu0 %v193
    %v246 = vpop.f32.mrb[0].mxu0
    %v247 = vadd.f32 %v147, %v246
    %v248 = vpop.f32.mrb[0].mxu0
    %v249 = vpop.f32.mrb[0].mxu0
    %v250 = vadd.f32 %v150, %v249
    %v251 = vpop.f32.mrb[0].mxu0
    %252 = vmatprep.mubr.bf16.mxu0 0
    %253 = vmatmul.mubr.bf16.gmra.mrb[0].mxu0 %v196
    %v254 = vpop.f32.mrb[0].mxu0
    %v255 = vadd.f32 %v155, %v254
    %v256 = vpop.f32.mrb[0].mxu0
    %v257 = vpop.f32.mrb[0].mxu0
    %v258 = vadd.f32 %v158, %v257
    %v259 = vpop.f32.mrb[0].mxu0
    %260 = vmatprep.mubr.bf16.mxu0 0
    %261 = vmatmul.mubr.bf16.gmra.mrb[0].mxu0 %v199
    %v262 = vpop.f32.mrb[0].mxu0
    %v263 = vadd.f32 %v163, %v262
    %v264 = vpop.f32.mrb[0].mxu0
    %v265 = vpop.f32.mrb[0].mxu0
    %v266 = vadd.f32 %v166, %v265
    %v267 = vpop.f32.mrb[0].mxu0
    %268 = vdwg.mxu0
    %v269 = vld [vmem:[%s3] sm:$0x1]
    %v271 = vlaneseq
    %v272 = vshrl.u32 %v271, 7
    %v273 = vsub.s32 0, %v272
    %v274 = vrot.slane %v269, %v273
    %v276 = vadd.f32 %v239, %v274
    %v277 = vadd.f32 %v242, %v274
    %v278 = vadd.f32 %v247, %v274
    %v279 = vadd.f32 %v250, %v274
    %v280 = vadd.f32 %v255, %v274
    %v281 = vadd.f32 %v258, %v274
    %v282 = vadd.f32 %v263, %v274
    %v283 = vadd.f32 %v266, %v274
    %v284 = vmul.f32 %v276, 0.2
    %v285 = vmul.f32 %v277, 0.2
    %v286 = vmul.f32 %v278, 0.2
    %v287 = vmul.f32 %v279, 0.2
    %v288 = vmul.f32 %v280, 0.2
    %v289 = vmul.f32 %v281, 0.2
    %v290 = vmul.f32 %v282, 0.2
    %v291 = vmul.f32 %v283, 0.2
    %v292 = vmax.f32 %v276, %v284
    %v293 = vmax.f32 %v277, %v285
    %v294 = vmax.f32 %v278, %v286
    %v295 = vmax.f32 %v279, %v287
    %v296 = vmax.f32 %v280, %v288
    %v297 = vmax.f32 %v281, %v289
    %v298 = vmax.f32 %v282, %v290
    %v299 = vmax.f32 %v283, %v291
    %v300 = vpack.c.bf16 %v293, %v292
    %v301 = vpack.c.bf16 %v295, %v294
    %v302 = vpack.c.bf16 %v297, %v296
    %v303 = vpack.c.bf16 %v299, %v298
    %v304 = vld [vmem:[%s4] sm:$0xf]
    %v305 = vld [vmem:[%s4 + $0x4] sm:$0xf]
    %v306 = vld [vmem:[%s4 + $0x8] sm:$0xf]
    %v307 = vld [vmem:[%s4 + $0xc] sm:$0xf]
    %v308 = vld [vmem:[%s5] sm:$0xf]
    %v309 = vld [vmem:[%s5 + $0x4] sm:$0xf]
    %v310 = vld [vmem:[%s5 + $0x8] sm:$0xf]
    %v311 = vld [vmem:[%s5 + $0xc] sm:$0xf]
    %v316 = vunpack.c.l.b16 %v308
    %v317 = vunpack.c.l.b16 %v309
    %v318 = vunpack.c.l.b16 %v310
    %v319 = vunpack.c.l.b16 %v311
    %v320 = vpack.c.b16 %v317, %v316
    %v321 = vpack.c.b16 %v319, %v318
    %vm324 = vcmask 261120
    %v326 = vsel %vm324, %v302, 0
    %v329 = vsel %vm324, %v303, 0
    %331 = vmatprep.subr.bf16.mxu0 0
    %332 = vmatpush1.bf16.msra.mxu0 %v320
    %333 = vmatprep.subr.bf16.mxu0 0
    %334 = vmatpush1.bf16.msra.mxu0 %v321
    %335 = vmatprep.subr.bf16.mxu0 0
    %336 = vmatpush1.bf16.msra.mxu0 0
    %337 = vmatprep.subr.bf16.mxu0 0
    %338 = vmatpush1.bf16.msra.mxu0 0
    %339 = vmatprep.subr.bf16.mxu0 0
    %340 = vmatpush1.bf16.msra.mxu0 0
    %341 = vmatprep.subr.bf16.mxu0 0
    %342 = vmatpush1.bf16.msra.mxu0 0
    %343 = vmatprep.subr.bf16.mxu0 0
    %344 = vmatpush1.bf16.msra.mxu0 0
    %345 = vmatprep.subr.bf16.mxu0 0
    %346 = vmatpush1.bf16.msra.mxu0 0
    %347 = vmatprep.subr.bf16.mxu0 0
    %348 = vmatpush1.bf16.msra.mxu0 0
    %349 = vmatprep.subr.bf16.mxu0 0
    %350 = vmatpush1.bf16.msra.mxu0 0
    %351 = vmatprep.subr.bf16.mxu0 0
    %352 = vmatpush1.bf16.msra.mxu0 0
    %353 = vmatprep.subr.bf16.mxu0 0
    %354 = vmatpush1.bf16.msra.mxu0 0
    %355 = vmatprep.subr.bf16.mxu0 0
    %356 = vmatpush1.bf16.msra.mxu0 0
    %357 = vmatprep.subr.bf16.mxu0 0
    %358 = vmatpush1.bf16.msra.mxu0 0
    %359 = vmatprep.subr.bf16.mxu0 0
    %360 = vmatpush1.bf16.msra.mxu0 0
    %361 = vmatprep.subr.bf16.mxu0 0
    %362 = vmatpush1.bf16.msra.mxu0 0
    %363 = vmatprep.mubr.bf16.mxu0 0
    %364 = vmatmul.mubr.bf16.gmra.mrb[0].mxu0 %v326
    %v365 = vpop.f32.mrb[0].mxu0
    %v366 = vadd.f32 0.0, %v365
    %v367 = vpop.f32.mrb[0].mxu0
    %v368 = vpop.f32.mrb[0].mxu0
    %v369 = vadd.f32 0.0, %v368
    %v370 = vpop.f32.mrb[0].mxu0
    %371 = vmatprep.mubr.bf16.mxu0 0
    %372 = vmatmul.mubr.bf16.gmra.mrb[0].mxu0 %v329
    %v373 = vpop.f32.mrb[0].mxu0
    %v374 = vadd.f32 0.0, %v373
    %v375 = vpop.f32.mrb[0].mxu0
    %v376 = vpop.f32.mrb[0].mxu0
    %v377 = vadd.f32 0.0, %v376
    %v378 = vpop.f32.mrb[0].mxu0
    %379 = vdwg.mxu0
    %v384 = vunpack.c.l.b16 %v304
    %v385 = vunpack.c.l.b16 %v305
    %v386 = vunpack.c.l.b16 %v306
    %v387 = vunpack.c.l.b16 %v307
    %v388 = vpack.c.b16 %v385, %v384
    %v389 = vpack.c.b16 %v387, %v386
    %v393 = vsel %vm324, %v300, 0
    %v396 = vsel %vm324, %v301, 0
    %398 = vmatprep.subr.bf16.mxu0 0
    %399 = vmatpush1.bf16.msra.mxu0 %v388
    %400 = vmatprep.subr.bf16.mxu0 0
    %401 = vmatpush1.bf16.msra.mxu0 %v389
    %402 = vmatprep.subr.bf16.mxu0 0
    %403 = vmatpush1.bf16.msra.mxu0 0
    %404 = vmatprep.subr.bf16.mxu0 0
    %405 = vmatpush1.bf16.msra.mxu0 0
    %406 = vmatprep.subr.bf16.mxu0 0
    %407 = vmatpush1.bf16.msra.mxu0 0
    %408 = vmatprep.subr.bf16.mxu0 0
    %409 = vmatpush1.bf16.msra.mxu0 0
    %410 = vmatprep.subr.bf16.mxu0 0
    %411 = vmatpush1.bf16.msra.mxu0 0
    %412 = vmatprep.subr.bf16.mxu0 0
    %413 = vmatpush1.bf16.msra.mxu0 0
    %414 = vmatprep.subr.bf16.mxu0 0
    %415 = vmatpush1.bf16.msra.mxu0 0
    %416 = vmatprep.subr.bf16.mxu0 0
    %417 = vmatpush1.bf16.msra.mxu0 0
    %418 = vmatprep.subr.bf16.mxu0 0
    %419 = vmatpush1.bf16.msra.mxu0 0
    %420 = vmatprep.subr.bf16.mxu0 0
    %421 = vmatpush1.bf16.msra.mxu0 0
    %422 = vmatprep.subr.bf16.mxu0 0
    %423 = vmatpush1.bf16.msra.mxu0 0
    %424 = vmatprep.subr.bf16.mxu0 0
    %425 = vmatpush1.bf16.msra.mxu0 0
    %426 = vmatprep.subr.bf16.mxu0 0
    %427 = vmatpush1.bf16.msra.mxu0 0
    %428 = vmatprep.subr.bf16.mxu0 0
    %429 = vmatpush1.bf16.msra.mxu0 0
    %430 = vmatprep.mubr.bf16.mxu0 0
    %431 = vmatmul.mubr.bf16.gmra.mrb[0].mxu0 %v393
    %v432 = vpop.f32.mrb[0].mxu0
    %v433 = vadd.f32 %v366, %v432
    %v434 = vpop.f32.mrb[0].mxu0
    %v435 = vpop.f32.mrb[0].mxu0
    %v436 = vadd.f32 %v369, %v435
    %v437 = vpop.f32.mrb[0].mxu0
    %438 = vmatprep.mubr.bf16.mxu0 0
    %439 = vmatmul.mubr.bf16.gmra.mrb[0].mxu0 %v396
    %v440 = vpop.f32.mrb[0].mxu0
    %v441 = vadd.f32 %v374, %v440
    %v442 = vpop.f32.mrb[0].mxu0
    %v443 = vpop.f32.mrb[0].mxu0
    %v444 = vadd.f32 %v377, %v443
    %v445 = vpop.f32.mrb[0].mxu0
    %446 = vdwg.mxu0
    %v447 = vld [vmem:[%s6] sm:$0x1]
    %v449 = vlaneseq
    %v450 = vshrl.u32 %v449, 7
    %v451 = vsub.s32 0, %v450
    %v452 = vrot.slane %v447, %v451
    %v454 = vadd.f32 %v433, %v452
    %v455 = vadd.f32 %v436, %v452
    %v456 = vadd.f32 %v441, %v452
    %v457 = vadd.f32 %v444, %v452
    %v458 = vmul.f32 %v454, 0.2
    %v459 = vmul.f32 %v455, 0.2
    %v460 = vmul.f32 %v456, 0.2
    %v461 = vmul.f32 %v457, 0.2
    %v462 = vmax.f32 %v454, %v458
    %v463 = vmax.f32 %v455, %v459
    %v464 = vmax.f32 %v456, %v460
    %v465 = vmax.f32 %v457, %v461
    %v466 = vpack.c.bf16 %v463, %v462
    %v467 = vpack.c.bf16 %v465, %v464
    %v468 = vld [vmem:[%s7] sm:$0xf]
    %v469 = vld [vmem:[%s7 + $0x4] sm:$0xf]
    %v470 = vld [vmem:[%s7 + $0x8] sm:$0xf]
    %v471 = vld [vmem:[%s7 + $0xc] sm:$0xf]
    %v472 = vld [vmem:[%s8] sm:$0xf]
    %v473 = vld [vmem:[%s8 + $0x4] sm:$0xf]
    %v474 = vld [vmem:[%s8 + $0x8] sm:$0xf]
    %v475 = vld [vmem:[%s8 + $0xc] sm:$0xf]
    %v480 = vunpack.c.l.b16 %v472
    %v481 = vunpack.c.l.b16 %v473
    %v482 = vunpack.c.l.b16 %v474
    %v483 = vunpack.c.l.b16 %v475
    %v484 = vpack.c.b16 %v481, %v480
    %v485 = vpack.c.b16 %v483, %v482
    %v489 = vsel %vm324, %v467, 0
    %491 = vmatprep.subr.bf16.mxu0 0
    %492 = vmatpush1.bf16.msra.mxu0 %v484
    %493 = vmatprep.subr.bf16.mxu0 0
    %494 = vmatpush1.bf16.msra.mxu0 %v485
    %495 = vmatprep.subr.bf16.mxu0 0
    %496 = vmatpush1.bf16.msra.mxu0 0
    %497 = vmatprep.subr.bf16.mxu0 0
    %498 = vmatpush1.bf16.msra.mxu0 0
    %499 = vmatprep.subr.bf16.mxu0 0
    %500 = vmatpush1.bf16.msra.mxu0 0
    %501 = vmatprep.subr.bf16.mxu0 0
    %502 = vmatpush1.bf16.msra.mxu0 0
    %503 = vmatprep.subr.bf16.mxu0 0
    %504 = vmatpush1.bf16.msra.mxu0 0
    %505 = vmatprep.subr.bf16.mxu0 0
    %506 = vmatpush1.bf16.msra.mxu0 0
    %507 = vmatprep.subr.bf16.mxu0 0
    %508 = vmatpush1.bf16.msra.mxu0 0
    %509 = vmatprep.subr.bf16.mxu0 0
    %510 = vmatpush1.bf16.msra.mxu0 0
    %511 = vmatprep.subr.bf16.mxu0 0
    %512 = vmatpush1.bf16.msra.mxu0 0
    %513 = vmatprep.subr.bf16.mxu0 0
    %514 = vmatpush1.bf16.msra.mxu0 0
    %515 = vmatprep.subr.bf16.mxu0 0
    %516 = vmatpush1.bf16.msra.mxu0 0
    %517 = vmatprep.subr.bf16.mxu0 0
    %518 = vmatpush1.bf16.msra.mxu0 0
    %519 = vmatprep.subr.bf16.mxu0 0
    %520 = vmatpush1.bf16.msra.mxu0 0
    %521 = vmatprep.subr.bf16.mxu0 0
    %522 = vmatpush1.bf16.msra.mxu0 0
    %523 = vmatprep.mubr.bf16.mxu0 0
    %524 = vmatmul.mubr.bf16.gmra.mrb[0].mxu0 %v489
    %v525 = vpop.f32.mrb[0].mxu0
    %v526 = vadd.f32 0.0, %v525
    %v527 = vpop.f32.mrb[0].mxu0
    %v528 = vpop.f32.mrb[0].mxu0
    %v529 = vadd.f32 0.0, %v528
    %v530 = vpop.f32.mrb[0].mxu0
    %531 = vdwg.mxu0
    %v536 = vunpack.c.l.b16 %v468
    %v537 = vunpack.c.l.b16 %v469
    %v538 = vunpack.c.l.b16 %v470
    %v539 = vunpack.c.l.b16 %v471
    %v540 = vpack.c.b16 %v537, %v536
    %v541 = vpack.c.b16 %v539, %v538
    %v545 = vsel %vm324, %v466, 0
    %547 = vmatprep.subr.bf16.mxu0 0
    %548 = vmatpush1.bf16.msra.mxu0 %v540
    %549 = vmatprep.subr.bf16.mxu0 0
    %550 = vmatpush1.bf16.msra.mxu0 %v541
    %551 = vmatprep.subr.bf16.mxu0 0
    %552 = vmatpush1.bf16.msra.mxu0 0
    %553 = vmatprep.subr.bf16.mxu0 0
    %554 = vmatpush1.bf16.msra.mxu0 0
    %555 = vmatprep.subr.bf16.mxu0 0
    %556 = vmatpush1.bf16.msra.mxu0 0
    %557 = vmatprep.subr.bf16.mxu0 0
    %558 = vmatpush1.bf16.msra.mxu0 0
    %559 = vmatprep.subr.bf16.mxu0 0
    %560 = vmatpush1.bf16.msra.mxu0 0
    %561 = vmatprep.subr.bf16.mxu0 0
    %562 = vmatpush1.bf16.msra.mxu0 0
    %563 = vmatprep.subr.bf16.mxu0 0
    %564 = vmatpush1.bf16.msra.mxu0 0
    %565 = vmatprep.subr.bf16.mxu0 0
    %566 = vmatpush1.bf16.msra.mxu0 0
    %567 = vmatprep.subr.bf16.mxu0 0
    %568 = vmatpush1.bf16.msra.mxu0 0
    %569 = vmatprep.subr.bf16.mxu0 0
    %570 = vmatpush1.bf16.msra.mxu0 0
    %571 = vmatprep.subr.bf16.mxu0 0
    %572 = vmatpush1.bf16.msra.mxu0 0
    %573 = vmatprep.subr.bf16.mxu0 0
    %574 = vmatpush1.bf16.msra.mxu0 0
    %575 = vmatprep.subr.bf16.mxu0 0
    %576 = vmatpush1.bf16.msra.mxu0 0
    %577 = vmatprep.subr.bf16.mxu0 0
    %578 = vmatpush1.bf16.msra.mxu0 0
    %579 = vmatprep.mubr.bf16.mxu0 0
    %580 = vmatmul.mubr.bf16.gmra.mrb[0].mxu0 %v545
    %v581 = vpop.f32.mrb[0].mxu0
    %v582 = vadd.f32 %v526, %v581
    %v583 = vpop.f32.mrb[0].mxu0
    %v584 = vpop.f32.mrb[0].mxu0
    %v585 = vadd.f32 %v529, %v584
    %v586 = vpop.f32.mrb[0].mxu0
    %587 = vdwg.mxu0
    %v588 = vld [vmem:[%s9] sm:$0x1]
    %v590 = vlaneseq
    %v591 = vshrl.u32 %v590, 7
    %v592 = vsub.s32 0, %v591
    %v593 = vrot.slane %v588, %v592
    %v595 = vadd.f32 %v582, %v593
    %v596 = vadd.f32 %v585, %v593
    %v597 = vmul.f32 %v595, 0.2
    %v598 = vmul.f32 %v596, 0.2
    %v599 = vmax.f32 %v595, %v597
    %v600 = vmax.f32 %v596, %v598
    %v601 = vpack.c.bf16 %v600, %v599
    %v602 = vld [vmem:[%s10] sm:$0xf]
    %v603 = vld [vmem:[%s10 + $0x4] sm:$0xf]
    %v604 = vld [vmem:[%s10 + $0x8] sm:$0xf]
    %v605 = vld [vmem:[%s10 + $0xc] sm:$0xf]
    %v606 = vld [vmem:[%s10 + $0x10] sm:$0xf]
    %v607 = vld [vmem:[%s10 + $0x14] sm:$0xf]
    %v608 = vld [vmem:[%s10 + $0x18] sm:$0xf]
    %v609 = vld [vmem:[%s10 + $0x1c] sm:$0xf]
    %v610 = vld [vmem:[%s11] sm:$0x1]
    %v612 = vlaneseq
    %v613 = vshrl.u32 %v612, 7
    %v614 = vsub.s32 0, %v613
    %v615 = vrot.slane %v610, %v614
    %v625 = vunpack.c.l.b16 %v602
    %v626 = vunpack.c.l.b16 %v603
    %v627 = vunpack.c.l.b16 %v604
    %v628 = vunpack.c.l.b16 %v605
    %v629 = vunpack.c.l.b16 %v606
    %v630 = vunpack.c.l.b16 %v607
    %v631 = vunpack.c.l.b16 %v608
    %v632 = vunpack.c.l.b16 %v609
    %v633 = vpack.c.b16 %v626, %v625
    %v634 = vpack.c.b16 %v628, %v627
    %v635 = vpack.c.b16 %v630, %v629
    %v636 = vpack.c.b16 %v632, %v631
    %vm641 = vcmask 523264
    %v643 = vsel %vm641, %v601, 0
    %645 = vmatprep.subr.bf16.mxu0 0
    %646 = vmatpush1.bf16.msra.mxu0 %v633
    %647 = vmatprep.subr.bf16.mxu0 0
    %648 = vmatpush1.bf16.msra.mxu0 %v634
    %649 = vmatprep.subr.bf16.mxu0 0
    %650 = vmatpush1.bf16.msra.mxu0 %v635
    %651 = vmatprep.subr.bf16.mxu0 0
    %652 = vmatpush1.bf16.msra.mxu0 %v636
    %653 = vmatprep.subr.bf16.mxu0 0
    %654 = vmatpush1.bf16.msra.mxu0 0
    %655 = vmatprep.subr.bf16.mxu0 0
    %656 = vmatpush1.bf16.msra.mxu0 0
    %657 = vmatprep.subr.bf16.mxu0 0
    %658 = vmatpush1.bf16.msra.mxu0 0
    %659 = vmatprep.subr.bf16.mxu0 0
    %660 = vmatpush1.bf16.msra.mxu0 0
    %661 = vmatprep.subr.bf16.mxu0 0
    %662 = vmatpush1.bf16.msra.mxu0 0
    %663 = vmatprep.subr.bf16.mxu0 0
    %664 = vmatpush1.bf16.msra.mxu0 0
    %665 = vmatprep.subr.bf16.mxu0 0
    %666 = vmatpush1.bf16.msra.mxu0 0
    %667 = vmatprep.subr.bf16.mxu0 0
    %668 = vmatpush1.bf16.msra.mxu0 0
    %669 = vmatprep.subr.bf16.mxu0 0
    %670 = vmatpush1.bf16.msra.mxu0 0
    %671 = vmatprep.subr.bf16.mxu0 0
    %672 = vmatpush1.bf16.msra.mxu0 0
    %673 = vmatprep.subr.bf16.mxu0 0
    %674 = vmatpush1.bf16.msra.mxu0 0
    %675 = vmatprep.subr.bf16.mxu0 0
    %676 = vmatpush1.bf16.msra.mxu0 0
    %677 = vmatprep.mubr.bf16.mxu0 0
    %678 = vmatmul.mubr.bf16.gmra.mrb[0].mxu0 %v643
    %v679 = vpop.f32.mrb[0].mxu0
    %v680 = vadd.f32 %v615, %v679
    %v681 = vpop.f32.mrb[0].mxu0
    %v682 = vpop.f32.mrb[0].mxu0
    %v683 = vadd.f32 %v615, %v682
    %v684 = vpop.f32.mrb[0].mxu0
    %685 = vdwg.mxu0
    %v686 = vmul.f32 %v680, 0.2
    %v687 = vmul.f32 %v683, 0.2
    %v688 = vmax.f32 %v680, %v686
    %v689 = vmax.f32 %v683, %v687
    %v690 = vpack.c.bf16 %v689, %v688
    %v691 = vld [vmem:[%s12] sm:$0xf]
    %v692 = vld [vmem:[%s12 + $0x4] sm:$0xf]
    %v693 = vld [vmem:[%s12 + $0x8] sm:$0xf]
    %v694 = vld [vmem:[%s12 + $0xc] sm:$0xf]
    %v695 = vld [vmem:[%s12 + $0x10] sm:$0xf]
    %v696 = vld [vmem:[%s12 + $0x14] sm:$0xf]
    %v697 = vld [vmem:[%s12 + $0x18] sm:$0xf]
    %v698 = vld [vmem:[%s12 + $0x1c] sm:$0xf]
    %v699 = vld [vmem:[%s12 + $0x20] sm:$0xf]
    %v700 = vld [vmem:[%s12 + $0x24] sm:$0xf]
    %v701 = vld [vmem:[%s12 + $0x28] sm:$0xf]
    %v702 = vld [vmem:[%s12 + $0x2c] sm:$0xf]
    %v703 = vld [vmem:[%s12 + $0x30] sm:$0xf]
    %v704 = vld [vmem:[%s12 + $0x34] sm:$0xf]
    %v705 = vld [vmem:[%s12 + $0x38] sm:$0xf]
    %v706 = vld [vmem:[%s12 + $0x3c] sm:$0xf]
    %v707 = vld [vmem:[%s13] sm:$0x1]
    %v709 = vlaneseq
    %v710 = vshrl.u32 %v709, 7
    %v711 = vsub.s32 0, %v710
    %v712 = vrot.slane %v707, %v711
    %v730 = vunpack.c.l.b16 %v691
    %v731 = vunpack.c.l.b16 %v692
    %v732 = vunpack.c.l.b16 %v693
    %v733 = vunpack.c.l.b16 %v694
    %v734 = vunpack.c.l.b16 %v695
    %v735 = vunpack.c.l.b16 %v696
    %v736 = vunpack.c.l.b16 %v697
    %v737 = vunpack.c.l.b16 %v698
    %v738 = vunpack.c.l.b16 %v699
    %v739 = vunpack.c.l.b16 %v700
    %v740 = vunpack.c.l.b16 %v701
    %v741 = vunpack.c.l.b16 %v702
    %v742 = vunpack.c.l.b16 %v703
    %v743 = vunpack.c.l.b16 %v704
    %v744 = vunpack.c.l.b16 %v705
    %v745 = vunpack.c.l.b16 %v706
    %v746 = vpack.c.b16 %v731, %v730
    %v747 = vpack.c.b16 %v733, %v732
    %v748 = vpack.c.b16 %v735, %v734
    %v749 = vpack.c.b16 %v737, %v736
    %v750 = vpack.c.b16 %v739, %v738
    %v751 = vpack.c.b16 %v741, %v740
    %v752 = vpack.c.b16 %v743, %v742
    %v753 = vpack.c.b16 %v745, %v744
    %762 = vmatprep.subr.bf16.mxu0 0
    %763 = vmatpush1.bf16.msra.mxu0 %v746
    %764 = vmatprep.subr.bf16.mxu0 0
    %765 = vmatpush1.bf16.msra.mxu0 %v747
    %766 = vmatprep.subr.bf16.mxu0 0
    %767 = vmatpush1.bf16.msra.mxu0 %v748
    %768 = vmatprep.subr.bf16.mxu0 0
    %769 = vmatpush1.bf16.msra.mxu0 %v749
    %770 = vmatprep.subr.bf16.mxu0 0
    %771 = vmatpush1.bf16.msra.mxu0 %v750
    %772 = vmatprep.subr.bf16.mxu0 0
    %773 = vmatpush1.bf16.msra.mxu0 %v751
    %774 = vmatprep.subr.bf16.mxu0 0
    %775 = vmatpush1.bf16.msra.mxu0 %v752
    %776 = vmatprep.subr.bf16.mxu0 0
    %777 = vmatpush1.bf16.msra.mxu0 %v753
    %778 = vmatprep.subr.bf16.mxu0 0
    %779 = vmatpush1.bf16.msra.mxu0 0
    %780 = vmatprep.subr.bf16.mxu0 0
    %781 = vmatpush1.bf16.msra.mxu0 0
    %782 = vmatprep.subr.bf16.mxu0 0
    %783 = vmatpush1.bf16.msra.mxu0 0
    %784 = vmatprep.subr.bf16.mxu0 0
    %785 = vmatpush1.bf16.msra.mxu0 0
    %786 = vmatprep.subr.bf16.mxu0 0
    %787 = vmatpush1.bf16.msra.mxu0 0
    %788 = vmatprep.subr.bf16.mxu0 0
    %789 = vmatpush1.bf16.msra.mxu0 0
    %790 = vmatprep.subr.bf16.mxu0 0
    %791 = vmatpush1.bf16.msra.mxu0 0
    %792 = vmatprep.subr.bf16.mxu0 0
    %793 = vmatpush1.bf16.msra.mxu0 0
    %794 = vmatprep.mubr.bf16.mxu0 0
    %795 = vmatmul.mubr.bf16.gmra.mrb[0].mxu0 %v690
    %v796 = vpop.f32.mrb[0].mxu0
    %v797 = vadd.f32 %v712, %v796
    %v798 = vpop.f32.mrb[0].mxu0
    %v799 = vpop.f32.mrb[0].mxu0
    %v800 = vadd.f32 %v712, %v799
    %v801 = vpop.f32.mrb[0].mxu0
    %802 = vdwg.mxu0
    %v803 = vtanh.pop %v797
    %v804 = vtanh.pop %v800
    %vm805 = vcmask 130048
    %806 = vst.msk [vmem:[#allocation2] sm:$0xff] %vm805, %v803
    %807 = vst.msk [vmem:[#allocation2 + $0x8] sm:$0xff] %vm805, %v804
    // Predicated region
    $region58: #{tpu_custom_call.1} parent=1 // pred_check
      _
    $region59: #{tpu_custom_call.1} parent=1 // pred_check_branch
      %809 = sbr.rel (0) target = $region61
    $region60: #{tpu_custom_call.1} parent=1 // pred_region
      %s811 = ssub.s32 256, 256
      %812 = vsyncadd [#allocation3], %s811
      %s813 = sshll.u32 [#allocation2], 4
      %s814 = int_to_ptr.vmem [resolvable:$true] %s813
      %819 = dma.vmem_to_hbm [thread:$0]  %s814, 256, %s14, [#allocation3], 128, 128, 8
    $region61: #{tpu_custom_call.1} parent=1 // pred_fallthru
      _
    // Predicated region
    $region62: #{tpu_custom_call.1} parent=1 // pred_check
      _
    $region63: #{tpu_custom_call.1} parent=1 // pred_check_branch
      %821 = sbr.rel (0) target = $region65
    $region64: #{tpu_custom_call.1} parent=1 // pred_region
      %822 = dma.done [#allocation3], 256
    $region65: #{tpu_custom_call.1} parent=1 // pred_fallthru
      _
    %823 = vsyncpa [#allocation3], 1

</llo_original>
